<compile_context>
chip_gen: v7x
topology: tpu7x:2x2x1
jax: 0.10.0
libtpu: 0.0.40
codegen_flags: <defaults>
</compile_context>

<pallas_src>
import functools

import jax
import jax.numpy as jnp
from jax.experimental import pallas as pl
from jax.experimental.pallas import tpu as pltpu


# ----------------------------------------------------------------------------
# Pallas kernels
# ----------------------------------------------------------------------------
def _projector_kernel(z_ref, w_ref, b_ref, o_ref):
    # z: (B, Zsum), w: (Zsum, D), b: (1, D) -> o: (B, D)
    o_ref[...] = (
        jnp.dot(z_ref[...], w_ref[...], preferred_element_type=jnp.float32)
        + b_ref[...]
    )


def pallas_fused_projector(z, w, b):
    B, Z = z.shape
    D = w.shape[1]
    return pl.pallas_call(
        _projector_kernel,
        out_shape=jax.ShapeDtypeStruct((B, D), jnp.float32),
        grid=(1,),
        in_specs=[
            pl.BlockSpec((B, Z), lambda i: (0, 0)),
            pl.BlockSpec((Z, D), lambda i: (0, 0)),
            pl.BlockSpec((1, D), lambda i: (0, 0)),
        ],
        out_specs=pl.BlockSpec((B, D), lambda i: (0, 0)),
        compiler_params=pltpu.CompilerParams(dimension_semantics=("arbitrary",)),
    )(z, w, b)


def _deblock_kernel(x_ref, upT_ref, wT_ref, b_ref, o_ref, *, seq_len, apply_elu):
    # x_ref  : (1, C_in, V_in)   one batch element, channels-first (V on lanes)
    # upT_ref: (S, V_in, V_out)  gather-folded, transposed upsample matrices
    #                            upT[s, j, v] = up[idx[v, s], j]
    # wT_ref : (S, C_out, C_in)  SpiralConv weight split per spiral position
    # b_ref  : (C_out, 1)
    # o_ref  : (1, C_out, V_out)
    xt = x_ref[0]  # (C_in, V_in)

    acc = jnp.zeros(o_ref.shape[1:], dtype=jnp.float32)  # (C_out, V_out)
    # Static unrolled loop (S=9): per-iteration live values are just `t` and
    # the accumulator, so vreg pressure stays bounded.  The accumulation over
    # s is a K-tiled (C_out, S*V_in) @ (S*V_in, V_out) matmul.
    for s in range(seq_len):
        t = jnp.dot(wT_ref[s], xt, preferred_element_type=jnp.float32)       # (C_out, V_in)
        acc = acc + jnp.dot(t, upT_ref[s], preferred_element_type=jnp.float32)  # (C_out, V_out)
    acc = acc + b_ref[...]

    if apply_elu:
        # ELU(alpha=1): x if x > 0 else exp(x) - 1  (clamp exp arg to avoid inf*0)
        acc = jnp.where(acc > 0.0, acc, jnp.exp(jnp.minimum(acc, 0.0)) - 1.0)

    o_ref[0] = acc


def pallas_spiral_deblock(x, upT, wT, b, apply_elu):
    # x: (B, C_in, V_in) channels-first; returns (B, C_out, V_out) channels-first.
    B, C_in, V_in = x.shape
    S, _, V_out = upT.shape
    C_out = wT.shape[1]
    kernel = functools.partial(_deblock_kernel, seq_len=S, apply_elu=apply_elu)
    return pl.pallas_call(
        kernel,
        out_shape=jax.ShapeDtypeStruct((B, C_out, V_out), jnp.float32),
        grid=(B,),
        in_specs=[
            pl.BlockSpec((1, C_in, V_in), lambda bi: (bi, 0, 0)),
            pl.BlockSpec((S, V_in, V_out), lambda bi: (0, 0, 0)),
            pl.BlockSpec((S, C_out, C_in), lambda bi: (0, 0, 0)),
            pl.BlockSpec((C_out, 1), lambda bi: (0, 0)),
        ],
        out_specs=pl.BlockSpec((1, C_out, V_out), lambda bi: (bi, 0, 0)),
        compiler_params=pltpu.CompilerParams(dimension_semantics=("parallel",)),
    )(x, upT, wT, b)


# ----------------------------------------------------------------------------
# Parameter / template construction (deterministic, synthetic)
# ----------------------------------------------------------------------------
def xavier_uniform(key, out_dim, in_dim):
    bound = (6.0 / (in_dim + out_dim)) ** 0.5
    return jax.random.uniform(key, (out_dim, in_dim), jnp.float32, -bound, bound)


class SpiralDecoderPallas:
    def __init__(self, key, latent_channels, hidden_channels, out_channels,
                 vert_counts, seq_length=9):
        # vert_counts: vertex count per mesh level, finest -> coarsest.
        # TODO(synk): preprocess_template (mesh file loading) replaced by a
        # deterministic synthetic template built in-script.
        assert len(hidden_channels) == len(vert_counts) - 1
        self.latent_channels = tuple(latent_channels)
        self.hidden_channels = tuple(hidden_channels)
        self.out_channels = out_channels
        self.seq_length = seq_length

        n_levels = len(vert_counts) - 1
        keys = iter(jax.random.split(key, 64))

        # synthetic up_transform[i]: (vert_counts[i], vert_counts[i+1])
        self.up_transform = []
        self.spiral_indices = []
        for i in range(n_levels):
            v_fine, v_coarse = vert_counts[i], vert_counts[i + 1]
            up = jax.random.uniform(next(keys), (v_fine, v_coarse), jnp.float32) / v_coarse
            self.up_transform.append(up)
            idx = jax.random.randint(next(keys), (v_fine, seq_length), 0, v_fine, jnp.int32)
            idx = idx.at[:, 0].set(jnp.arange(v_fine, dtype=jnp.int32))  # spiral starts at self
            self.spiral_indices.append(idx)

        self.n_verts = int(self.up_transform[-1].shape[1])

        # projector output-channel split (mirrors the PyTorch module exactly)
        C = sum(self.latent_channels)
        full_size = self.hidden_channels[0]
        out_sizes = [int(x * full_size / C) for x in self.latent_channels]
        L = full_size - sum(out_sizes)
        assert L >= 0
        j = 0
        while L > 0:
            out_sizes[j] += 1
            j += 1
            L -= 1
        assert all(x > 0 for x in out_sizes)
        self.out_sizes = out_sizes

        # --- projectors: Linear(z_dim, osz * n_verts); bias=0, weight=xavier
        # Kept in torch layout for the reference path, and fused into a single
        # block-placement weight (with channels-first output ordering) for the
        # Pallas path.
        self.proj_params = []          # reference: list of (wT (Z,D), b (1,D))
        proj_torch_weights = []
        for z_dim, osz in zip(self.latent_channels, out_sizes):
            w = xavier_uniform(next(keys), osz * self.n_verts, z_dim)  # (D, Z) torch layout
            proj_torch_weights.append(w)
            self.proj_params.append(
                (jnp.transpose(w), jnp.zeros((1, osz * self.n_verts), jnp.float32))
            )

        sum_z = sum(self.latent_channels)
        hidden0 = self.hidden_channels[0]
        w_fused = jnp.zeros((sum_z, hidden0 * self.n_verts), jnp.float32)
        z_off, c_off = 0, 0
        for w, z_dim, osz in zip(proj_torch_weights, self.latent_channels, out_sizes):
            # torch row index = v*osz + c  ->  channels-first column index c*n_verts + v
            w_cf = jnp.transpose(
                w.reshape(self.n_verts, osz, z_dim), (1, 0, 2)
            ).reshape(osz * self.n_verts, z_dim)
            w_fused = w_fused.at[
                z_off:z_off + z_dim,
                c_off * self.n_verts:(c_off + osz) * self.n_verts,
            ].set(jnp.transpose(w_cf))
            z_off += z_dim
            c_off += osz
        self.proj_fused_w = w_fused                                    # (sumZ, hidden0*n_verts)
        self.proj_fused_b = jnp.zeros((1, hidden0 * self.n_verts), jnp.float32)

        # --- decoder layers
        inp_list = tuple(self.hidden_channels)
        out_list = tuple(self.hidden_channels[1:]) + (self.out_channels,)
        self.layers = []
        for li, (c_in, c_out) in enumerate(zip(inp_list, out_list)):
            idx = self.spiral_indices[-li - 1]          # (V_out, S)
            up = self.up_transform[-li - 1]             # (V_out, V_in)
            # Gather folded into the upsample matrix (no one-hot tensor):
            #   upT[s, j, v] = up[idx[v, s], j]
            up_g = up[idx, :]                           # (V_out, S, V_in)
            upT = jnp.transpose(up_g, (1, 2, 0))        # (S, V_in, V_out)
            # SpiralConv weight: torch Linear(S*C_in, C_out).weight is (C_out, S*C_in)
            w_t = xavier_uniform(next(keys), c_out, seq_length * c_in)   # (C_out, S*C_in)
            w_flat = jnp.transpose(w_t)                                  # (S*C_in, C_out)  (ref)
            wT = jnp.transpose(w_t.reshape(c_out, seq_length, c_in), (1, 0, 2))  # (S, C_out, C_in)
            b_col = jnp.zeros((c_out, 1), jnp.float32)   # kernel bias (channels-first)
            b_row = jnp.zeros((1, c_out), jnp.float32)   # reference bias
            self.layers.append(dict(
                upT=upT, wT=wT, b_col=b_col,
                up=up, idx=idx, w_flat=w_flat, b_row=b_row,
                elu=(li + 1 < len(out_list)),  # last layer = identity
            ))

    # ------------------------------------------------------------------ Pallas forward
    def decode(self, z_list):
        if not isinstance(z_list, (list, tuple)):
            z_list = (z_list,)
        assert len(z_list) == len(self.latent_channels)
        B = z_list[0].shape[0]
        hidden0 = self.hidden_channels[0]

        # Fused projectors: one matmul, output already in channels-first order.
        z_cat = jnp.concatenate(z_list, axis=-1)                        # (B, sumZ)
        y = pallas_fused_projector(z_cat, self.proj_fused_w, self.proj_fused_b)
        x = y.reshape(B, hidden0, self.n_verts)                         # (B, C, V) channels-first

        for layer in self.layers:
            x = pallas_spiral_deblock(
                x, layer["upT"], layer["wT"], layer["b_col"], layer["elu"]
            )
        # back to the module's (B, V, C) layout
        return jnp.transpose(x, (0, 2, 1))

    # ------------------------------------------------------------------ pure-jnp reference
    def decode_ref(self, z_list):
        x_list = []
        for z, (wp, bp) in zip(z_list, self.proj_params):
            y = z @ wp + bp
            x_list.append(y.reshape(z.shape[0], self.n_verts, -1))
        x = jnp.concatenate(x_list, axis=-1)
        for layer in self.layers:
            x = jnp.einsum("ij,bjc->bic", layer["up"], x)                        # pool_bvc
            B, v_out = x.shape[0], layer["up"].shape[0]
            gathered = x[:, layer["idx"].reshape(-1), :].reshape(B, v_out, -1)   # spiral gather
            x = gathered @ layer["w_flat"] + layer["b_row"]
            if layer["elu"]:
                x = jnp.where(x > 0.0, x, jnp.exp(jnp.minimum(x, 0.0)) - 1.0)
        return x


# ----------------------------------------------------------------------------
if __name__ == "__main__":
    key = jax.random.PRNGKey(0)
    k_model, k_z0, k_z1 = jax.random.split(key, 3)

    # small synthetic template: vertex counts finest -> coarsest
    vert_counts = (64, 32, 16, 8)
    latent_channels = (6, 10)
    hidden_channels = (32, 32, 16)
    out_channels = 3
    B = 2

    model = SpiralDecoderPallas(
        k_model, latent_channels, hidden_channels, out_channels,
        vert_counts, seq_length=9,
    )

    z0 = jax.random.normal(k_z0, (B, latent_channels[0]), jnp.float32)
    z1 = jax.random.normal(k_z1, (B, latent_channels[1]), jnp.float32)
    z_list = (z0, z1)

    out = model.decode(z_list)
    out = jax.block_until_ready(out)
    assert out.shape == (B, vert_counts[0], out_channels), out.shape

    ref = jax.block_until_ready(model.decode_ref(z_list))
    assert jnp.allclose(out, ref, atol=1e-3, rtol=1e-3), (
        float(jnp.max(jnp.abs(out - ref)))
    )

    print("KERNEL_OK")
</pallas_src>

<mosaic_0001>
module attributes {stable_mosaic.version = 11 : i64} {
  func.func @_projector_kernel(%arg0: i32, %arg1: memref<2x16xf32, #tpu.memory_space<vmem>>, %arg2: memref<16x256xf32, #tpu.memory_space<vmem>>, %arg3: memref<1x256xf32, #tpu.memory_space<vmem>>, %arg4: memref<2x256xf32, #tpu.memory_space<vmem>>) attributes {dimension_semantics = [#tpu.dimension_semantics<arbitrary>], iteration_bounds = array<i64: 1>, scalar_prefetch = 0 : i64, scratch_operands = 0 : i64, tpu.core_type = #tpu.core_type<tc>, window_params = [{pipeline_mode = #tpu.pipeline_mode<synchronous>, transform_indices = @transform_0, window_bounds = array<i64: 2, 16>}, {pipeline_mode = #tpu.pipeline_mode<synchronous>, transform_indices = @transform_1, window_bounds = array<i64: 16, 256>}, {pipeline_mode = #tpu.pipeline_mode<synchronous>, transform_indices = @transform_2, window_bounds = array<i64: 1, 256>}, {pipeline_mode = #tpu.pipeline_mode<synchronous>, transform_indices = @transform_3, window_bounds = array<i64: 2, 256>}]} {
    %c0 = arith.constant 0 : index
    %c0_0 = arith.constant 0 : index
    %0 = vector.load %arg1[%c0, %c0_0] : memref<2x16xf32, #tpu.memory_space<vmem>>, vector<2x16xf32>
    %c0_1 = arith.constant 0 : index
    %c0_2 = arith.constant 0 : index
    %1 = vector.load %arg2[%c0_1, %c0_2] : memref<16x256xf32, #tpu.memory_space<vmem>>, vector<16x256xf32>
    %cst = arith.constant dense<0.000000e+00> : vector<2x256xf32>
    %2 = tpu.matmul %0, %1, %cst {dimension_numbers = #tpu.dot_dimension_numbers<[1], [0], [0], [1], [0, 0, 1, 1], [], []>} : vector<2x16xf32>, vector<16x256xf32>, vector<2x256xf32> -> vector<2x256xf32>
    %c0_3 = arith.constant 0 : index
    %c0_4 = arith.constant 0 : index
    %3 = vector.load %arg3[%c0_3, %c0_4] : memref<1x256xf32, #tpu.memory_space<vmem>>, vector<1x256xf32>
    %4 = vector.broadcast %3 : vector<1x256xf32> to vector<2x256xf32>
    %5 = arith.addf %2, %4 : vector<2x256xf32>
    %c0_5 = arith.constant 0 : index
    %c0_6 = arith.constant 0 : index
    %6 = vector.load %arg4[%c0_5, %c0_6] : memref<2x256xf32, #tpu.memory_space<vmem>>, vector<2x256xf32>
    tpu.vector_store %arg4[%c0_5, %c0_6], %5 {strides = array<i32>} : memref<2x256xf32, #tpu.memory_space<vmem>>, vector<2x256xf32>,
    return
  }
  func.func @transform_0(%arg0: i32) -> (i32, i32) {
    %c0_i32 = arith.constant 0 : i32
    %c0_i32_0 = arith.constant 0 : i32
    %c0_i32_1 = arith.constant 0 : i32
    return %c0_i32, %c0_i32_0 : i32, i32
  }
  func.func @transform_1(%arg0: i32) -> (i32, i32) {
    %c0_i32 = arith.constant 0 : i32
    %c0_i32_0 = arith.constant 0 : i32
    %c0_i32_1 = arith.constant 0 : i32
    return %c0_i32, %c0_i32_0 : i32, i32
  }
  func.func @transform_2(%arg0: i32) -> (i32, i32) {
    %c0_i32 = arith.constant 0 : i32
    %c0_i32_0 = arith.constant 0 : i32
    %c0_i32_1 = arith.constant 0 : i32
    return %c0_i32, %c0_i32_0 : i32, i32
  }
  func.func @transform_3(%arg0: i32) -> (i32, i32) {
    %c0_i32 = arith.constant 0 : i32
    %c0_i32_0 = arith.constant 0 : i32
    %c0_i32_1 = arith.constant 0 : i32
    return %c0_i32, %c0_i32_0 : i32, i32
  }
}

</mosaic_0001>

<llo_original>
// kernel: tpu_custom_call.1
$region0: #{tpu_custom_call.1}
  #allocation0 [shape = 'u32[]', space=smem, size = 0x4, offset = 0x4, fixed_abs, tag = 'smem constant byte address 0x4 - core index']
  #allocation1 [shape = 'u32[144,128]{1,0:T(1,128)}', space=vmem, size = 0x12000, scoped, tag = 'internal scratch']
  %s0 = inlined_call_operand.hbm [shape: f32[2,16], index: 0, kind: input, shape index: {}]
  %s1 = inlined_call_operand.hbm [shape: f32[16,256], index: 1, kind: input, shape index: {}]
  %s2 = inlined_call_operand.vmem [shape: f32[1,256], index: 2, kind: input, shape index: {}]
  %s3 = inlined_call_operand.hbm [shape: f32[2,256], index: 3, kind: output, shape index: {}]
  %s4 = sld [smem:[#allocation0]]
  $region30: #{tpu_custom_call.1} parent=0
    _
  %s6 = ssub.s32 1, %s4
  %s7 = scalar_select 0, %s6, %s4
  $region1: #{tpu_custom_call.1} parent=0
    #allocation2 [shape = 'u8[1024]{0}', space=vmem, size = 0x400, scoped, tag = 'input window, operand 0, single buffered']
    #allocation3 [shape = 's32[1]{0}', space=sflag, size = 0x4, scoped, tag = 'scoped memory for tpu_custom_call.1']
    #allocation4 [shape = 's32[1]{0}', space=sflag, size = 0x4, scoped, tag = 'scoped memory for tpu_custom_call.1']
    #allocation5 [shape = 'u8[16384]{0}', space=vmem, size = 0x4000, scoped, tag = 'input window, operand 1, single buffered']
    #allocation6 [shape = 's32[1]{0}', space=sflag, size = 0x4, scoped, tag = 'scoped memory for tpu_custom_call.1']
    #allocation7 [shape = 'u8[2048]{0}', space=vmem, size = 0x800, scoped, tag = 'output window, operand 0, single buffered']
    %8 = vsyncpa [#allocation3], 0
    %9 = vsyncpa [#allocation6], 0
    %10 = vsyncpa [#allocation4], 0
    // Predicated region
    $region2: #{tpu_custom_call.1} parent=1 // pred_check
      _
    $region3: #{tpu_custom_call.1} parent=1 // pred_check_branch
      %12 = sbr.rel (0) target = $region5
    $region4: #{tpu_custom_call.1} parent=1 // pred_region
      %s14 = ssub.s32 32, 32
      %15 = vsyncadd [#allocation3], %s14
      %s17 = sshll.u32 [#allocation2], 4
      %s18 = int_to_ptr.vmem [resolvable:$true] %s17
      %20 = dma.hbm_to_vmem [thread:$0]  %s0, 32, %s18, [#allocation3]
    $region5: #{tpu_custom_call.1} parent=1 // pred_fallthru
      _
    // Predicated region
    $region6: #{tpu_custom_call.1} parent=1 // pred_check
      _
    $region7: #{tpu_custom_call.1} parent=1 // pred_check_branch
      %22 = sbr.rel (0) target = $region9
    $region8: #{tpu_custom_call.1} parent=1 // pred_region
      %s24 = ssub.s32 512, 512
      %25 = vsyncadd [#allocation6], %s24
      %s26 = sshll.u32 [#allocation5], 4
      %s27 = int_to_ptr.vmem [resolvable:$true] %s26
      %32 = dma.hbm_to_vmem [thread:$0]  %s1, 512, %s27, [#allocation6], 256, 256, 16
    $region9: #{tpu_custom_call.1} parent=1 // pred_fallthru
      _
    // Predicated region
    $region10: #{tpu_custom_call.1} parent=1 // pred_check
      _
    $region11: #{tpu_custom_call.1} parent=1 // pred_check_branch
      %34 = sbr.rel (0) target = $region13
    $region12: #{tpu_custom_call.1} parent=1 // pred_region
      _
    $region13: #{tpu_custom_call.1} parent=1 // pred_fallthru
      _
    // Predicated region
    $region14: #{tpu_custom_call.1} parent=1 // pred_check
      _
    $region15: #{tpu_custom_call.1} parent=1 // pred_check_branch
      %36 = sbr.rel (0) target = $region17
    $region16: #{tpu_custom_call.1} parent=1 // pred_region
      %37 = dma.done [#allocation3], 32
    $region17: #{tpu_custom_call.1} parent=1 // pred_fallthru
      _
    // Predicated region
    $region18: #{tpu_custom_call.1} parent=1 // pred_check
      _
    $region19: #{tpu_custom_call.1} parent=1 // pred_check_branch
      %39 = sbr.rel (0) target = $region21
    $region20: #{tpu_custom_call.1} parent=1 // pred_region
      %40 = dma.done [#allocation6], 512
    $region21: #{tpu_custom_call.1} parent=1 // pred_fallthru
      _
    %v41 = vld [vmem:[#allocation2] sm:$0x3]
    %v42 = vld [vmem:[#allocation5] sm:$0xff]
    %v43 = vld [vmem:[#allocation5 + $0x8] sm:$0xff]
    %v44 = vld [vmem:[#allocation5 + $0x10] sm:$0xff]
    %v45 = vld [vmem:[#allocation5 + $0x18] sm:$0xff]
    %v46 = vld [vmem:[%s2] sm:$0x3]
    %v48 = vlaneseq
    %v49 = vshrl.u32 %v48, 7
    %v50 = vsub.s32 0, %v49
    %v51 = vrot.slane %v46, %v50
    %v52 = vlaneseq
    %v53 = vshrl.u32 %v52, 7
    %v54 = vsub.s32 1, %v53
    %v55 = vrot.slane %v46, %v54
    %vm58 = vcmask 130048
    %v60 = vsel %vm58, %v41, 0
    %62 = vmatprep.subr.mxu0 %v43
    %63 = vmatpush1.msra.mxu0 %v42
    %64 = vmatprep.subr.mxu0 %v45
    %65 = vmatpush1.msra.mxu0 %v44
    %66 = vmatprep.subr.mxu0 0.0
    %67 = vmatpush1.msra.mxu0 0.0
    %68 = vmatprep.subr.mxu0 0.0
    %69 = vmatpush1.msra.mxu0 0.0
    %70 = vmatprep.subr.mxu0 0.0
    %71 = vmatpush1.msra.mxu0 0.0
    %72 = vmatprep.subr.mxu0 0.0
    %73 = vmatpush1.msra.mxu0 0.0
    %74 = vmatprep.subr.mxu0 0.0
    %75 = vmatpush1.msra.mxu0 0.0
    %76 = vmatprep.subr.mxu0 0.0
    %77 = vmatpush1.msra.mxu0 0.0
    %78 = vmatprep.subr.mxu0 0.0
    %79 = vmatpush1.msra.mxu0 0.0
    %80 = vmatprep.subr.mxu0 0.0
    %81 = vmatpush1.msra.mxu0 0.0
    %82 = vmatprep.subr.mxu0 0.0
    %83 = vmatpush1.msra.mxu0 0.0
    %84 = vmatprep.subr.mxu0 0.0
    %85 = vmatpush1.msra.mxu0 0.0
    %86 = vmatprep.subr.mxu0 0.0
    %87 = vmatpush1.msra.mxu0 0.0
    %88 = vmatprep.subr.mxu0 0.0
    %89 = vmatpush1.msra.mxu0 0.0
    %90 = vmatprep.subr.mxu0 0.0
    %91 = vmatpush1.msra.mxu0 0.0
    %92 = vmatprep.subr.mxu0 0.0
    %93 = vmatpush1.msra.mxu0 0.0
    %94 = vmatprep.subr.mxu0 0.0
    %95 = vmatpush1.msra.mxu0 0.0
    %96 = vmatprep.subr.mxu0 0.0
    %97 = vmatpush1.msra.mxu0 0.0
    %98 = vmatprep.subr.mxu0 0.0
    %99 = vmatpush1.msra.mxu0 0.0
    %100 = vmatprep.subr.mxu0 0.0
    %101 = vmatpush1.msra.mxu0 0.0
    %102 = vmatprep.subr.mxu0 0.0
    %103 = vmatpush1.msra.mxu0 0.0
    %104 = vmatprep.subr.mxu0 0.0
    %105 = vmatpush1.msra.mxu0 0.0
    %106 = vmatprep.subr.mxu0 0.0
    %107 = vmatpush1.msra.mxu0 0.0
    %108 = vmatprep.subr.mxu0 0.0
    %109 = vmatpush1.msra.mxu0 0.0
    %110 = vmatprep.subr.mxu0 0.0
    %111 = vmatpush1.msra.mxu0 0.0
    %112 = vmatprep.subr.mxu0 0.0
    %113 = vmatpush1.msra.mxu0 0.0
    %114 = vmatprep.subr.mxu0 0.0
    %115 = vmatpush1.msra.mxu0 0.0
    %116 = vmatprep.subr.mxu0 0.0
    %117 = vmatpush1.msra.mxu0 0.0
    %118 = vmatprep.subr.mxu0 0.0
    %119 = vmatpush1.msra.mxu0 0.0
    %120 = vmatprep.subr.mxu0 0.0
    %121 = vmatpush1.msra.mxu0 0.0
    %122 = vmatprep.subr.mxu0 0.0
    %123 = vmatpush1.msra.mxu0 0.0
    %124 = vmatprep.subr.mxu0 0.0
    %125 = vmatpush1.msra.mxu0 0.0
    %126 = vmatprep.mubr.f32.mxu0 0.0
    %127 = vmatmul.mubr.f32.gmra.mrb[0].mxu0 %v60
    %v128 = vpop.f32.mrb[0].mxu0
    %v129 = vadd.f32 %v51, %v128
    %v130 = vpop.f32.mrb[0].mxu0
    %v131 = vadd.f32 %v55, %v130
    %132 = vdwg.mxu0
    %v135 = vcombine.low %v129, %v131
    %v137 = vunpack.c.l.s4 1983009808
    %v138 = vunpack.c.0.s8 %v137
    %v139 = vlaneseq
    %v140 = vshrl.u32 %v139, 7
    %v141 = vsub.s32 %v138, %v140
    %v142 = vrot.slane %v135, %v141
    %144 = vst [vmem:[#allocation7] sm:$0xf] %v142
    // Predicated region
    $region22: #{tpu_custom_call.1} parent=1 // pred_check
      _
    $region23: #{tpu_custom_call.1} parent=1 // pred_check_branch
      %146 = sbr.rel (0) target = $region25
    $region24: #{tpu_custom_call.1} parent=1 // pred_region
      %s148 = ssub.s32 64, 64
      %149 = vsyncadd [#allocation4], %s148
      %s151 = sshll.u32 [#allocation7], 4
      %s152 = int_to_ptr.vmem [resolvable:$true] %s151
      %154 = dma.vmem_to_hbm [thread:$0]  %s152, 64, %s3, [#allocation4]
    $region25: #{tpu_custom_call.1} parent=1 // pred_fallthru
      _
    // Predicated region
    $region26: #{tpu_custom_call.1} parent=1 // pred_check
      _
    $region27: #{tpu_custom_call.1} parent=1 // pred_check_branch
      %156 = sbr.rel (0) target = $region29
    $region28: #{tpu_custom_call.1} parent=1 // pred_region
      %157 = dma.done [#allocation4], 64
    $region29: #{tpu_custom_call.1} parent=1 // pred_fallthru
      _
    %158 = vsyncpa [#allocation3], 1
    %159 = vsyncpa [#allocation6], 1
    %160 = vsyncpa [#allocation4], 1

</llo_original>
